<compile_context>
chip_gen: v7x
topology: tpu7x:2x2x1
jax: 0.10.0
libtpu: 0.0.40
codegen_flags: <defaults>
</compile_context>

<pallas_src>
import jax
import jax.numpy as jnp
from jax import lax
from jax.experimental import pallas as pl
from jax.experimental.pallas import tpu as pltpu

NUM_COPIES = 16  # cat([v1, v2] * 8, dim=1) -> 16 identical column blocks


def cat_mm_kernel(x_ref, o_ref):
    x = x_ref[...]
    # v1 = v2 = mm(x1, x1): compute once on the MXU, f32 accumulate, full
    # precision (don't let default precision demote f32 inputs to bf16 passes).
    v = jnp.dot(
        x, x,
        preferred_element_type=jnp.float32,
        precision=lax.Precision.HIGHEST,
    )
    # Cast once on the small [N, N] tile, before replication.
    v = v.astype(o_ref.dtype)
    n = v.shape[1]
    # Replicate via static-slice stores (ref views are free); avoids a
    # lane-axis concatenate of 16-lane pieces (cross-lane relayout).
    for c in range(NUM_COPIES):
        o_ref[:, c * n:(c + 1) * n] = v


def cat_mm(x1):
    n, m = x1.shape
    assert n == m, "torch.mm(x1, x1) requires a square x1"
    out_shape = jax.ShapeDtypeStruct((n, NUM_COPIES * n), x1.dtype)
    itemsize = jnp.dtype(x1.dtype).itemsize
    return pl.pallas_call(
        cat_mm_kernel,
        out_shape=out_shape,
        # Whole arrays resident in VMEM; no grid / pipeline for this tiny problem.
        in_specs=[pl.BlockSpec(memory_space=pltpu.MemorySpace.VMEM)],
        out_specs=pl.BlockSpec(memory_space=pltpu.MemorySpace.VMEM),
        cost_estimate=pl.CostEstimate(
            flops=2 * n * n * n,
            transcendentals=0,
            bytes_accessed=itemsize * (n * n + NUM_COPIES * n * n),
        ),
    )(x1)


if __name__ == "__main__":
    key = jax.random.PRNGKey(0)
    N = 16  # square input so mm(x1, x1) is valid; multiple of 8 for clean sublane layout
    x1 = jax.random.normal(key, (N, N), dtype=jnp.float32)

    out = cat_mm(x1)
    out = jax.block_until_ready(out)

    # Reference in plain JAX (same precision as the kernel).
    v = jnp.dot(x1, x1, precision=lax.Precision.HIGHEST)
    ref = jnp.concatenate([v] * NUM_COPIES, axis=1)
    assert out.shape == (N, NUM_COPIES * N), out.shape
    assert jnp.allclose(out, ref, atol=1e-4, rtol=1e-4)

    print("KERNEL_OK")
</pallas_src>

<mosaic_0001>
module attributes {stable_mosaic.version = 11 : i64} {
  func.func @cat_mm_kernel(%arg0: memref<16x16xf32, #tpu.memory_space<vmem>>, %arg1: memref<16x256xf32, #tpu.memory_space<vmem>>) attributes {dimension_semantics = [], scalar_prefetch = 0 : i64, scratch_operands = 0 : i64, tpu.core_type = #tpu.core_type<tc>} {
    %c0 = arith.constant 0 : index
    %c0_0 = arith.constant 0 : index
    %0 = vector.load %arg0[%c0, %c0_0] : memref<16x16xf32, #tpu.memory_space<vmem>>, vector<16x16xf32>
    %cst = arith.constant dense<0.000000e+00> : vector<16x16xf32>
    %1 = tpu.matmul %0, %0, %cst {dimension_numbers = #tpu.dot_dimension_numbers<[1], [0], [0], [1], [0, 0, 1, 1], [], []>, precision = #tpu.contract_precision<fp32>} : vector<16x16xf32>, vector<16x16xf32>, vector<16x16xf32> -> vector<16x16xf32>
    %c0_1 = arith.constant 0 : index
    %c0_2 = arith.constant 0 : index
    %2 = vector.load %arg1[%c0_1, %c0_2] : memref<16x256xf32, #tpu.memory_space<vmem>>, vector<16x16xf32>
    tpu.vector_store %arg1[%c0_1, %c0_2], %1 {strides = array<i32>} : memref<16x256xf32, #tpu.memory_space<vmem>>, vector<16x16xf32>,
    %c0_3 = arith.constant 0 : index
    %c16 = arith.constant 16 : index
    %3 = vector.load %arg1[%c0_3, %c16] : memref<16x256xf32, #tpu.memory_space<vmem>>, vector<16x16xf32>
    tpu.vector_store %arg1[%c0_3, %c16], %1 {strides = array<i32>} : memref<16x256xf32, #tpu.memory_space<vmem>>, vector<16x16xf32>,
    %c0_4 = arith.constant 0 : index
    %c32 = arith.constant 32 : index
    %4 = vector.load %arg1[%c0_4, %c32] : memref<16x256xf32, #tpu.memory_space<vmem>>, vector<16x16xf32>
    tpu.vector_store %arg1[%c0_4, %c32], %1 {strides = array<i32>} : memref<16x256xf32, #tpu.memory_space<vmem>>, vector<16x16xf32>,
    %c0_5 = arith.constant 0 : index
    %c48 = arith.constant 48 : index
    %5 = vector.load %arg1[%c0_5, %c48] : memref<16x256xf32, #tpu.memory_space<vmem>>, vector<16x16xf32>
    tpu.vector_store %arg1[%c0_5, %c48], %1 {strides = array<i32>} : memref<16x256xf32, #tpu.memory_space<vmem>>, vector<16x16xf32>,
    %c0_6 = arith.constant 0 : index
    %c64 = arith.constant 64 : index
    %6 = vector.load %arg1[%c0_6, %c64] : memref<16x256xf32, #tpu.memory_space<vmem>>, vector<16x16xf32>
    tpu.vector_store %arg1[%c0_6, %c64], %1 {strides = array<i32>} : memref<16x256xf32, #tpu.memory_space<vmem>>, vector<16x16xf32>,
    %c0_7 = arith.constant 0 : index
    %c80 = arith.constant 80 : index
    %7 = vector.load %arg1[%c0_7, %c80] : memref<16x256xf32, #tpu.memory_space<vmem>>, vector<16x16xf32>
    tpu.vector_store %arg1[%c0_7, %c80], %1 {strides = array<i32>} : memref<16x256xf32, #tpu.memory_space<vmem>>, vector<16x16xf32>,
    %c0_8 = arith.constant 0 : index
    %c96 = arith.constant 96 : index
    %8 = vector.load %arg1[%c0_8, %c96] : memref<16x256xf32, #tpu.memory_space<vmem>>, vector<16x16xf32>
    tpu.vector_store %arg1[%c0_8, %c96], %1 {strides = array<i32>} : memref<16x256xf32, #tpu.memory_space<vmem>>, vector<16x16xf32>,
    %c0_9 = arith.constant 0 : index
    %c112 = arith.constant 112 : index
    %9 = vector.load %arg1[%c0_9, %c112] : memref<16x256xf32, #tpu.memory_space<vmem>>, vector<16x16xf32>
    tpu.vector_store %arg1[%c0_9, %c112], %1 {strides = array<i32>} : memref<16x256xf32, #tpu.memory_space<vmem>>, vector<16x16xf32>,
    %c0_10 = arith.constant 0 : index
    %c128 = arith.constant 128 : index
    %10 = vector.load %arg1[%c0_10, %c128] : memref<16x256xf32, #tpu.memory_space<vmem>>, vector<16x16xf32>
    tpu.vector_store %arg1[%c0_10, %c128], %1 {strides = array<i32>} : memref<16x256xf32, #tpu.memory_space<vmem>>, vector<16x16xf32>,
    %c0_11 = arith.constant 0 : index
    %c144 = arith.constant 144 : index
    %11 = vector.load %arg1[%c0_11, %c144] : memref<16x256xf32, #tpu.memory_space<vmem>>, vector<16x16xf32>
    tpu.vector_store %arg1[%c0_11, %c144], %1 {strides = array<i32>} : memref<16x256xf32, #tpu.memory_space<vmem>>, vector<16x16xf32>,
    %c0_12 = arith.constant 0 : index
    %c160 = arith.constant 160 : index
    %12 = vector.load %arg1[%c0_12, %c160] : memref<16x256xf32, #tpu.memory_space<vmem>>, vector<16x16xf32>
    tpu.vector_store %arg1[%c0_12, %c160], %1 {strides = array<i32>} : memref<16x256xf32, #tpu.memory_space<vmem>>, vector<16x16xf32>,
    %c0_13 = arith.constant 0 : index
    %c176 = arith.constant 176 : index
    %13 = vector.load %arg1[%c0_13, %c176] : memref<16x256xf32, #tpu.memory_space<vmem>>, vector<16x16xf32>
    tpu.vector_store %arg1[%c0_13, %c176], %1 {strides = array<i32>} : memref<16x256xf32, #tpu.memory_space<vmem>>, vector<16x16xf32>,
    %c0_14 = arith.constant 0 : index
    %c192 = arith.constant 192 : index
    %14 = vector.load %arg1[%c0_14, %c192] : memref<16x256xf32, #tpu.memory_space<vmem>>, vector<16x16xf32>
    tpu.vector_store %arg1[%c0_14, %c192], %1 {strides = array<i32>} : memref<16x256xf32, #tpu.memory_space<vmem>>, vector<16x16xf32>,
    %c0_15 = arith.constant 0 : index
    %c208 = arith.constant 208 : index
    %15 = vector.load %arg1[%c0_15, %c208] : memref<16x256xf32, #tpu.memory_space<vmem>>, vector<16x16xf32>
    tpu.vector_store %arg1[%c0_15, %c208], %1 {strides = array<i32>} : memref<16x256xf32, #tpu.memory_space<vmem>>, vector<16x16xf32>,
    %c0_16 = arith.constant 0 : index
    %c224 = arith.constant 224 : index
    %16 = vector.load %arg1[%c0_16, %c224] : memref<16x256xf32, #tpu.memory_space<vmem>>, vector<16x16xf32>
    tpu.vector_store %arg1[%c0_16, %c224], %1 {strides = array<i32>} : memref<16x256xf32, #tpu.memory_space<vmem>>, vector<16x16xf32>,
    %c0_17 = arith.constant 0 : index
    %c240 = arith.constant 240 : index
    %17 = vector.load %arg1[%c0_17, %c240] : memref<16x256xf32, #tpu.memory_space<vmem>>, vector<16x16xf32>
    tpu.vector_store %arg1[%c0_17, %c240], %1 {strides = array<i32>} : memref<16x256xf32, #tpu.memory_space<vmem>>, vector<16x16xf32>,
    return
  }
}

</mosaic_0001>

<llo_original>
// kernel: tpu_custom_call.1
$region0: #{tpu_custom_call.1}
  #allocation0 [shape = 'u32[]', space=smem, size = 0x4, offset = 0x4, fixed_abs, tag = 'smem constant byte address 0x4 - core index']
  #allocation1 [shape = 'u32[144,128]{1,0:T(1,128)}', space=vmem, size = 0x12000, scoped, tag = 'internal scratch']
  %s0 = inlined_call_operand.hbm [shape: f32[16,16], index: 0, kind: input, shape index: {}]
  %s1 = inlined_call_operand.hbm [shape: f32[16,256], index: 1, kind: output, shape index: {}]
  %s2 = sld [smem:[#allocation0]]
  $region18: #{tpu_custom_call.1} parent=0
    _
  %s4 = ssub.s32 1, %s2
  %s5 = scalar_select 0, %s4, %s2
  $region1: #{tpu_custom_call.1} parent=0
    #allocation2 [shape = 'u8[8192]{0}', space=vmem, size = 0x2000, scoped, tag = 'input window, operand 0, single buffered']
    #allocation3 [shape = 's32[1]{0}', space=sflag, size = 0x4, scoped, tag = 'scoped memory for tpu_custom_call.1']
    #allocation4 [shape = 's32[1]{0}', space=sflag, size = 0x4, scoped, tag = 'scoped memory for tpu_custom_call.1']
    #allocation5 [shape = 'u8[16384]{0}', space=vmem, size = 0x4000, scoped, tag = 'output window, operand 0, single buffered']
    %6 = vsyncpa [#allocation3], 0
    %7 = vsyncpa [#allocation4], 0
    // Predicated region
    $region2: #{tpu_custom_call.1} parent=1 // pred_check
      _
    $region3: #{tpu_custom_call.1} parent=1 // pred_check_branch
      %9 = sbr.rel (0) target = $region5
    $region4: #{tpu_custom_call.1} parent=1 // pred_region
      %s11 = ssub.s32 256, 256
      %12 = vsyncadd [#allocation3], %s11
      %s13 = sshll.u32 [#allocation2], 4
      %s14 = int_to_ptr.vmem [resolvable:$true] %s13
      %19 = dma.hbm_to_vmem [thread:$0]  %s0, 256, %s14, [#allocation3], 128, 128, 8
    $region5: #{tpu_custom_call.1} parent=1 // pred_fallthru
      _
    // Predicated region
    $region6: #{tpu_custom_call.1} parent=1 // pred_check
      _
    $region7: #{tpu_custom_call.1} parent=1 // pred_check_branch
      %21 = sbr.rel (0) target = $region9
    $region8: #{tpu_custom_call.1} parent=1 // pred_region
      %22 = dma.done [#allocation3], 256
    $region9: #{tpu_custom_call.1} parent=1 // pred_fallthru
      _
    %v23 = vld [vmem:[#allocation2] sm:$0xff]
    %v24 = vld [vmem:[#allocation2 + $0x8] sm:$0xff]
    %vm25 = vcmask 130048
    %v27 = vsel %vm25, %v23, 0
    %v30 = vsel %vm25, %v24, 0
    %32 = vmatprep.subr.mxu0 0.0
    %v33 = vand.u32 %v23, 4294901760
    %34 = vmatpush1.msra.mxu0 %v33
    %35 = vmatprep.subr.mxu0 0.0
    %v36 = vand.u32 %v24, 4294901760
    %37 = vmatpush1.msra.mxu0 %v36
    %38 = vmatprep.subr.mxu0 0.0
    %39 = vmatpush1.msra.mxu0 0.0
    %40 = vmatprep.subr.mxu0 0.0
    %41 = vmatpush1.msra.mxu0 0.0
    %42 = vmatprep.subr.mxu0 0.0
    %43 = vmatpush1.msra.mxu0 0.0
    %44 = vmatprep.subr.mxu0 0.0
    %45 = vmatpush1.msra.mxu0 0.0
    %46 = vmatprep.subr.mxu0 0.0
    %47 = vmatpush1.msra.mxu0 0.0
    %48 = vmatprep.subr.mxu0 0.0
    %49 = vmatpush1.msra.mxu0 0.0
    %50 = vmatprep.subr.mxu0 0.0
    %51 = vmatpush1.msra.mxu0 0.0
    %52 = vmatprep.subr.mxu0 0.0
    %53 = vmatpush1.msra.mxu0 0.0
    %54 = vmatprep.subr.mxu0 0.0
    %55 = vmatpush1.msra.mxu0 0.0
    %56 = vmatprep.subr.mxu0 0.0
    %57 = vmatpush1.msra.mxu0 0.0
    %58 = vmatprep.subr.mxu0 0.0
    %59 = vmatpush1.msra.mxu0 0.0
    %60 = vmatprep.subr.mxu0 0.0
    %61 = vmatpush1.msra.mxu0 0.0
    %62 = vmatprep.subr.mxu0 0.0
    %63 = vmatpush1.msra.mxu0 0.0
    %64 = vmatprep.subr.mxu0 0.0
    %65 = vmatpush1.msra.mxu0 0.0
    %66 = vmatprep.subr.mxu0 0.0
    %67 = vmatpush1.msra.mxu0 0.0
    %68 = vmatprep.subr.mxu0 0.0
    %69 = vmatpush1.msra.mxu0 0.0
    %70 = vmatprep.subr.mxu0 0.0
    %71 = vmatpush1.msra.mxu0 0.0
    %72 = vmatprep.subr.mxu0 0.0
    %73 = vmatpush1.msra.mxu0 0.0
    %74 = vmatprep.subr.mxu0 0.0
    %75 = vmatpush1.msra.mxu0 0.0
    %76 = vmatprep.subr.mxu0 0.0
    %77 = vmatpush1.msra.mxu0 0.0
    %78 = vmatprep.subr.mxu0 0.0
    %79 = vmatpush1.msra.mxu0 0.0
    %80 = vmatprep.subr.mxu0 0.0
    %81 = vmatpush1.msra.mxu0 0.0
    %82 = vmatprep.subr.mxu0 0.0
    %83 = vmatpush1.msra.mxu0 0.0
    %84 = vmatprep.subr.mxu0 0.0
    %85 = vmatpush1.msra.mxu0 0.0
    %86 = vmatprep.subr.mxu0 0.0
    %87 = vmatpush1.msra.mxu0 0.0
    %88 = vmatprep.subr.mxu0 0.0
    %89 = vmatpush1.msra.mxu0 0.0
    %90 = vmatprep.subr.mxu0 0.0
    %91 = vmatpush1.msra.mxu0 0.0
    %92 = vmatprep.subr.mxu0 0.0
    %93 = vmatpush1.msra.mxu0 0.0
    %94 = vmatprep.subr.mxu0 0.0
    %95 = vmatpush1.msra.mxu0 0.0
    %96 = vmatprep.subr.mxu0 0.0
    %97 = vmatpush1.msra.mxu0 0.0
    %98 = vmatprep.mubr.f32.mxu0 0.0
    %v99 = vand.u32 %v27, 4294901760
    %v100 = vsub.f32 %v27, %v99
    %v101 = vand.u32 %v100, 4294901760
    %v102 = vsub.f32 %v100, %v101
    %v103 = vand.u32 %v102, 4294901760
    %104 = vmatmul.mubr.f32.gmra.mrb[0].mxu0 %v103
    %v105 = vpop.f32.mrb[0].mxu0
    %v106 = vadd.f32 0.0, %v105
    %v107 = vpop.f32.mrb[0].mxu0
    %108 = vmatprep.mubr.f32.mxu0 0.0
    %v109 = vand.u32 %v30, 4294901760
    %v110 = vsub.f32 %v30, %v109
    %v111 = vand.u32 %v110, 4294901760
    %v112 = vsub.f32 %v110, %v111
    %v113 = vand.u32 %v112, 4294901760
    %114 = vmatmul.mubr.f32.gmra.mrb[0].mxu0 %v113
    %v115 = vpop.f32.mrb[0].mxu0
    %v116 = vadd.f32 0.0, %v115
    %v117 = vpop.f32.mrb[0].mxu0
    %118 = vdwg.mxu0
    %119 = vmatprep.subr.mxu0 0.0
    %v120 = vand.u32 %v23, 4294901760
    %v121 = vsub.f32 %v23, %v120
    %v122 = vand.u32 %v121, 4294901760
    %v123 = vsub.f32 %v121, %v122
    %v124 = vand.u32 %v123, 4294901760
    %125 = vmatpush1.msra.mxu0 %v124
    %126 = vmatprep.subr.mxu0 0.0
    %v127 = vand.u32 %v24, 4294901760
    %v128 = vsub.f32 %v24, %v127
    %v129 = vand.u32 %v128, 4294901760
    %v130 = vsub.f32 %v128, %v129
    %v131 = vand.u32 %v130, 4294901760
    %132 = vmatpush1.msra.mxu0 %v131
    %133 = vmatprep.subr.mxu0 0.0
    %134 = vmatpush1.msra.mxu0 0.0
    %135 = vmatprep.subr.mxu0 0.0
    %136 = vmatpush1.msra.mxu0 0.0
    %137 = vmatprep.subr.mxu0 0.0
    %138 = vmatpush1.msra.mxu0 0.0
    %139 = vmatprep.subr.mxu0 0.0
    %140 = vmatpush1.msra.mxu0 0.0
    %141 = vmatprep.subr.mxu0 0.0
    %142 = vmatpush1.msra.mxu0 0.0
    %143 = vmatprep.subr.mxu0 0.0
    %144 = vmatpush1.msra.mxu0 0.0
    %145 = vmatprep.subr.mxu0 0.0
    %146 = vmatpush1.msra.mxu0 0.0
    %147 = vmatprep.subr.mxu0 0.0
    %148 = vmatpush1.msra.mxu0 0.0
    %149 = vmatprep.subr.mxu0 0.0
    %150 = vmatpush1.msra.mxu0 0.0
    %151 = vmatprep.subr.mxu0 0.0
    %152 = vmatpush1.msra.mxu0 0.0
    %153 = vmatprep.subr.mxu0 0.0
    %154 = vmatpush1.msra.mxu0 0.0
    %155 = vmatprep.subr.mxu0 0.0
    %156 = vmatpush1.msra.mxu0 0.0
    %157 = vmatprep.subr.mxu0 0.0
    %158 = vmatpush1.msra.mxu0 0.0
    %159 = vmatprep.subr.mxu0 0.0
    %160 = vmatpush1.msra.mxu0 0.0
    %161 = vmatprep.subr.mxu0 0.0
    %162 = vmatpush1.msra.mxu0 0.0
    %163 = vmatprep.subr.mxu0 0.0
    %164 = vmatpush1.msra.mxu0 0.0
    %165 = vmatprep.subr.mxu0 0.0
    %166 = vmatpush1.msra.mxu0 0.0
    %167 = vmatprep.subr.mxu0 0.0
    %168 = vmatpush1.msra.mxu0 0.0
    %169 = vmatprep.subr.mxu0 0.0
    %170 = vmatpush1.msra.mxu0 0.0
    %171 = vmatprep.subr.mxu0 0.0
    %172 = vmatpush1.msra.mxu0 0.0
    %173 = vmatprep.subr.mxu0 0.0
    %174 = vmatpush1.msra.mxu0 0.0
    %175 = vmatprep.subr.mxu0 0.0
    %176 = vmatpush1.msra.mxu0 0.0
    %177 = vmatprep.subr.mxu0 0.0
    %178 = vmatpush1.msra.mxu0 0.0
    %179 = vmatprep.subr.mxu0 0.0
    %180 = vmatpush1.msra.mxu0 0.0
    %181 = vmatprep.subr.mxu0 0.0
    %182 = vmatpush1.msra.mxu0 0.0
    %183 = vmatprep.subr.mxu0 0.0
    %184 = vmatpush1.msra.mxu0 0.0
    %185 = vmatprep.subr.mxu0 0.0
    %186 = vmatpush1.msra.mxu0 0.0
    %187 = vmatprep.subr.mxu0 0.0
    %188 = vmatpush1.msra.mxu0 0.0
    %189 = vmatprep.subr.mxu0 0.0
    %190 = vmatpush1.msra.mxu0 0.0
    %191 = vmatprep.subr.mxu0 0.0
    %192 = vmatpush1.msra.mxu0 0.0
    %193 = vmatprep.mubr.f32.mxu0 0.0
    %v194 = vand.u32 %v27, 4294901760
    %195 = vmatmul.mubr.f32.gmra.mrb[0].mxu0 %v194
    %v196 = vpop.f32.mrb[0].mxu0
    %v197 = vadd.f32 %v106, %v196
    %v198 = vpop.f32.mrb[0].mxu0
    %199 = vmatprep.mubr.f32.mxu0 0.0
    %v200 = vand.u32 %v30, 4294901760
    %201 = vmatmul.mubr.f32.gmra.mrb[0].mxu0 %v200
    %v202 = vpop.f32.mrb[0].mxu0
    %v203 = vadd.f32 %v116, %v202
    %v204 = vpop.f32.mrb[0].mxu0
    %205 = vdwg.mxu0
    %206 = vmatprep.subr.mxu0 0.0
    %v207 = vand.u32 %v23, 4294901760
    %v208 = vsub.f32 %v23, %v207
    %209 = vmatpush1.msra.mxu0 %v208
    %210 = vmatprep.subr.mxu0 0.0
    %v211 = vand.u32 %v24, 4294901760
    %v212 = vsub.f32 %v24, %v211
    %213 = vmatpush1.msra.mxu0 %v212
    %214 = vmatprep.subr.mxu0 0.0
    %215 = vmatpush1.msra.mxu0 0.0
    %216 = vmatprep.subr.mxu0 0.0
    %217 = vmatpush1.msra.mxu0 0.0
    %218 = vmatprep.subr.mxu0 0.0
    %219 = vmatpush1.msra.mxu0 0.0
    %220 = vmatprep.subr.mxu0 0.0
    %221 = vmatpush1.msra.mxu0 0.0
    %222 = vmatprep.subr.mxu0 0.0
    %223 = vmatpush1.msra.mxu0 0.0
    %224 = vmatprep.subr.mxu0 0.0
    %225 = vmatpush1.msra.mxu0 0.0
    %226 = vmatprep.subr.mxu0 0.0
    %227 = vmatpush1.msra.mxu0 0.0
    %228 = vmatprep.subr.mxu0 0.0
    %229 = vmatpush1.msra.mxu0 0.0
    %230 = vmatprep.subr.mxu0 0.0
    %231 = vmatpush1.msra.mxu0 0.0
    %232 = vmatprep.subr.mxu0 0.0
    %233 = vmatpush1.msra.mxu0 0.0
    %234 = vmatprep.subr.mxu0 0.0
    %235 = vmatpush1.msra.mxu0 0.0
    %236 = vmatprep.subr.mxu0 0.0
    %237 = vmatpush1.msra.mxu0 0.0
    %238 = vmatprep.subr.mxu0 0.0
    %239 = vmatpush1.msra.mxu0 0.0
    %240 = vmatprep.subr.mxu0 0.0
    %241 = vmatpush1.msra.mxu0 0.0
    %242 = vmatprep.subr.mxu0 0.0
    %243 = vmatpush1.msra.mxu0 0.0
    %244 = vmatprep.subr.mxu0 0.0
    %245 = vmatpush1.msra.mxu0 0.0
    %246 = vmatprep.subr.mxu0 0.0
    %247 = vmatpush1.msra.mxu0 0.0
    %248 = vmatprep.subr.mxu0 0.0
    %249 = vmatpush1.msra.mxu0 0.0
    %250 = vmatprep.subr.mxu0 0.0
    %251 = vmatpush1.msra.mxu0 0.0
    %252 = vmatprep.subr.mxu0 0.0
    %253 = vmatpush1.msra.mxu0 0.0
    %254 = vmatprep.subr.mxu0 0.0
    %255 = vmatpush1.msra.mxu0 0.0
    %256 = vmatprep.subr.mxu0 0.0
    %257 = vmatpush1.msra.mxu0 0.0
    %258 = vmatprep.subr.mxu0 0.0
    %259 = vmatpush1.msra.mxu0 0.0
    %260 = vmatprep.subr.mxu0 0.0
    %261 = vmatpush1.msra.mxu0 0.0
    %262 = vmatprep.subr.mxu0 0.0
    %263 = vmatpush1.msra.mxu0 0.0
    %264 = vmatprep.subr.mxu0 0.0
    %265 = vmatpush1.msra.mxu0 0.0
    %266 = vmatprep.subr.mxu0 0.0
    %267 = vmatpush1.msra.mxu0 0.0
    %268 = vmatprep.subr.mxu0 0.0
    %269 = vmatpush1.msra.mxu0 0.0
    %270 = vmatprep.subr.mxu0 0.0
    %271 = vmatpush1.msra.mxu0 0.0
    %272 = vmatprep.subr.mxu0 0.0
    %273 = vmatpush1.msra.mxu0 0.0
    %274 = vmatprep.mubr.f32.mxu0 0.0
    %v275 = vand.u32 %v27, 4294901760
    %v276 = vsub.f32 %v27, %v275
    %277 = vmatmul.mubr.f32.gmra.mrb[0].mxu0 %v276
    %v278 = vpop.f32.mrb[0].mxu0
    %v279 = vadd.f32 %v197, %v278
    %v280 = vpop.f32.mrb[0].mxu0
    %281 = vmatprep.mubr.f32.mxu0 0.0
    %v282 = vand.u32 %v30, 4294901760
    %v283 = vsub.f32 %v30, %v282
    %284 = vmatmul.mubr.f32.gmra.mrb[0].mxu0 %v283
    %v285 = vpop.f32.mrb[0].mxu0
    %v286 = vadd.f32 %v203, %v285
    %v287 = vpop.f32.mrb[0].mxu0
    %288 = vdwg.mxu0
    %289 = vmatprep.subr.mxu0 0.0
    %v290 = vand.u32 %v23, 4294901760
    %291 = vmatpush1.msra.mxu0 %v290
    %292 = vmatprep.subr.mxu0 0.0
    %v293 = vand.u32 %v24, 4294901760
    %294 = vmatpush1.msra.mxu0 %v293
    %295 = vmatprep.subr.mxu0 0.0
    %296 = vmatpush1.msra.mxu0 0.0
    %297 = vmatprep.subr.mxu0 0.0
    %298 = vmatpush1.msra.mxu0 0.0
    %299 = vmatprep.subr.mxu0 0.0
    %300 = vmatpush1.msra.mxu0 0.0
    %301 = vmatprep.subr.mxu0 0.0
    %302 = vmatpush1.msra.mxu0 0.0
    %303 = vmatprep.subr.mxu0 0.0
    %304 = vmatpush1.msra.mxu0 0.0
    %305 = vmatprep.subr.mxu0 0.0
    %306 = vmatpush1.msra.mxu0 0.0
    %307 = vmatprep.subr.mxu0 0.0
    %308 = vmatpush1.msra.mxu0 0.0
    %309 = vmatprep.subr.mxu0 0.0
    %310 = vmatpush1.msra.mxu0 0.0
    %311 = vmatprep.subr.mxu0 0.0
    %312 = vmatpush1.msra.mxu0 0.0
    %313 = vmatprep.subr.mxu0 0.0
    %314 = vmatpush1.msra.mxu0 0.0
    %315 = vmatprep.subr.mxu0 0.0
    %316 = vmatpush1.msra.mxu0 0.0
    %317 = vmatprep.subr.mxu0 0.0
    %318 = vmatpush1.msra.mxu0 0.0
    %319 = vmatprep.subr.mxu0 0.0
    %320 = vmatpush1.msra.mxu0 0.0
    %321 = vmatprep.subr.mxu0 0.0
    %322 = vmatpush1.msra.mxu0 0.0
    %323 = vmatprep.subr.mxu0 0.0
    %324 = vmatpush1.msra.mxu0 0.0
    %325 = vmatprep.subr.mxu0 0.0
    %326 = vmatpush1.msra.mxu0 0.0
    %327 = vmatprep.subr.mxu0 0.0
    %328 = vmatpush1.msra.mxu0 0.0
    %329 = vmatprep.subr.mxu0 0.0
    %330 = vmatpush1.msra.mxu0 0.0
    %331 = vmatprep.subr.mxu0 0.0
    %332 = vmatpush1.msra.mxu0 0.0
    %333 = vmatprep.subr.mxu0 0.0
    %334 = vmatpush1.msra.mxu0 0.0
    %335 = vmatprep.subr.mxu0 0.0
    %336 = vmatpush1.msra.mxu0 0.0
    %337 = vmatprep.subr.mxu0 0.0
    %338 = vmatpush1.msra.mxu0 0.0
    %339 = vmatprep.subr.mxu0 0.0
    %340 = vmatpush1.msra.mxu0 0.0
    %341 = vmatprep.subr.mxu0 0.0
    %342 = vmatpush1.msra.mxu0 0.0
    %343 = vmatprep.subr.mxu0 0.0
    %344 = vmatpush1.msra.mxu0 0.0
    %345 = vmatprep.subr.mxu0 0.0
    %346 = vmatpush1.msra.mxu0 0.0
    %347 = vmatprep.subr.mxu0 0.0
    %348 = vmatpush1.msra.mxu0 0.0
    %349 = vmatprep.subr.mxu0 0.0
    %350 = vmatpush1.msra.mxu0 0.0
    %351 = vmatprep.subr.mxu0 0.0
    %352 = vmatpush1.msra.mxu0 0.0
    %353 = vmatprep.subr.mxu0 0.0
    %354 = vmatpush1.msra.mxu0 0.0
    %355 = vmatprep.mubr.f32.mxu0 0.0
    %v356 = vand.u32 %v27, 4294901760
    %v357 = vsub.f32 %v27, %v356
    %v358 = vand.u32 %v357, 4294901760
    %359 = vmatmul.mubr.f32.gmra.mrb[0].mxu0 %v358
    %v360 = vpop.f32.mrb[0].mxu0
    %v361 = vadd.f32 %v279, %v360
    %v362 = vpop.f32.mrb[0].mxu0
    %363 = vmatprep.mubr.f32.mxu0 0.0
    %v364 = vand.u32 %v30, 4294901760
    %v365 = vsub.f32 %v30, %v364
    %v366 = vand.u32 %v365, 4294901760
    %367 = vmatmul.mubr.f32.gmra.mrb[0].mxu0 %v366
    %v368 = vpop.f32.mrb[0].mxu0
    %v369 = vadd.f32 %v286, %v368
    %v370 = vpop.f32.mrb[0].mxu0
    %371 = vdwg.mxu0
    %372 = vmatprep.subr.mxu0 0.0
    %v373 = vand.u32 %v23, 4294901760
    %v374 = vsub.f32 %v23, %v373
    %v375 = vand.u32 %v374, 4294901760
    %376 = vmatpush1.msra.mxu0 %v375
    %377 = vmatprep.subr.mxu0 0.0
    %v378 = vand.u32 %v24, 4294901760
    %v379 = vsub.f32 %v24, %v378
    %v380 = vand.u32 %v379, 4294901760
    %381 = vmatpush1.msra.mxu0 %v380
    %382 = vmatprep.subr.mxu0 0.0
    %383 = vmatpush1.msra.mxu0 0.0
    %384 = vmatprep.subr.mxu0 0.0
    %385 = vmatpush1.msra.mxu0 0.0
    %386 = vmatprep.subr.mxu0 0.0
    %387 = vmatpush1.msra.mxu0 0.0
    %388 = vmatprep.subr.mxu0 0.0
    %389 = vmatpush1.msra.mxu0 0.0
    %390 = vmatprep.subr.mxu0 0.0
    %391 = vmatpush1.msra.mxu0 0.0
    %392 = vmatprep.subr.mxu0 0.0
    %393 = vmatpush1.msra.mxu0 0.0
    %394 = vmatprep.subr.mxu0 0.0
    %395 = vmatpush1.msra.mxu0 0.0
    %396 = vmatprep.subr.mxu0 0.0
    %397 = vmatpush1.msra.mxu0 0.0
    %398 = vmatprep.subr.mxu0 0.0
    %399 = vmatpush1.msra.mxu0 0.0
    %400 = vmatprep.subr.mxu0 0.0
    %401 = vmatpush1.msra.mxu0 0.0
    %402 = vmatprep.subr.mxu0 0.0
    %403 = vmatpush1.msra.mxu0 0.0
    %404 = vmatprep.subr.mxu0 0.0
    %405 = vmatpush1.msra.mxu0 0.0
    %406 = vmatprep.subr.mxu0 0.0
    %407 = vmatpush1.msra.mxu0 0.0
    %408 = vmatprep.subr.mxu0 0.0
    %409 = vmatpush1.msra.mxu0 0.0
    %410 = vmatprep.subr.mxu0 0.0
    %411 = vmatpush1.msra.mxu0 0.0
    %412 = vmatprep.subr.mxu0 0.0
    %413 = vmatpush1.msra.mxu0 0.0
    %414 = vmatprep.subr.mxu0 0.0
    %415 = vmatpush1.msra.mxu0 0.0
    %416 = vmatprep.subr.mxu0 0.0
    %417 = vmatpush1.msra.mxu0 0.0
    %418 = vmatprep.subr.mxu0 0.0
    %419 = vmatpush1.msra.mxu0 0.0
    %420 = vmatprep.subr.mxu0 0.0
    %421 = vmatpush1.msra.mxu0 0.0
    %422 = vmatprep.subr.mxu0 0.0
    %423 = vmatpush1.msra.mxu0 0.0
    %424 = vmatprep.subr.mxu0 0.0
    %425 = vmatpush1.msra.mxu0 0.0
    %426 = vmatprep.subr.mxu0 0.0
    %427 = vmatpush1.msra.mxu0 0.0
    %428 = vmatprep.subr.mxu0 0.0
    %429 = vmatpush1.msra.mxu0 0.0
    %430 = vmatprep.subr.mxu0 0.0
    %431 = vmatpush1.msra.mxu0 0.0
    %432 = vmatprep.subr.mxu0 0.0
    %433 = vmatpush1.msra.mxu0 0.0
    %434 = vmatprep.subr.mxu0 0.0
    %435 = vmatpush1.msra.mxu0 0.0
    %436 = vmatprep.subr.mxu0 0.0
    %437 = vmatpush1.msra.mxu0 0.0
    %438 = vmatprep.subr.mxu0 0.0
    %439 = vmatpush1.msra.mxu0 0.0
    %440 = vmatprep.subr.mxu0 0.0
    %441 = vmatpush1.msra.mxu0 0.0
    %442 = vmatprep.mubr.f32.mxu0 0.0
    %v443 = vand.u32 %v27, 4294901760
    %444 = vmatmul.mubr.f32.gmra.mrb[0].mxu0 %v443
    %v445 = vpop.f32.mrb[0].mxu0
    %v446 = vadd.f32 %v361, %v445
    %v447 = vpop.f32.mrb[0].mxu0
    %448 = vmatprep.mubr.f32.mxu0 0.0
    %v449 = vand.u32 %v30, 4294901760
    %450 = vmatmul.mubr.f32.gmra.mrb[0].mxu0 %v449
    %v451 = vpop.f32.mrb[0].mxu0
    %v452 = vadd.f32 %v369, %v451
    %v453 = vpop.f32.mrb[0].mxu0
    %454 = vdwg.mxu0
    %455 = vmatprep.subr.mxu0 0.0
    %v456 = vand.u32 %v23, 4294901760
    %457 = vmatpush1.msra.mxu0 %v456
    %458 = vmatprep.subr.mxu0 0.0
    %v459 = vand.u32 %v24, 4294901760
    %460 = vmatpush1.msra.mxu0 %v459
    %461 = vmatprep.subr.mxu0 0.0
    %462 = vmatpush1.msra.mxu0 0.0
    %463 = vmatprep.subr.mxu0 0.0
    %464 = vmatpush1.msra.mxu0 0.0
    %465 = vmatprep.subr.mxu0 0.0
    %466 = vmatpush1.msra.mxu0 0.0
    %467 = vmatprep.subr.mxu0 0.0
    %468 = vmatpush1.msra.mxu0 0.0
    %469 = vmatprep.subr.mxu0 0.0
    %470 = vmatpush1.msra.mxu0 0.0
    %471 = vmatprep.subr.mxu0 0.0
    %472 = vmatpush1.msra.mxu0 0.0
    %473 = vmatprep.subr.mxu0 0.0
    %474 = vmatpush1.msra.mxu0 0.0
    %475 = vmatprep.subr.mxu0 0.0
    %476 = vmatpush1.msra.mxu0 0.0
    %477 = vmatprep.subr.mxu0 0.0
    %478 = vmatpush1.msra.mxu0 0.0
    %479 = vmatprep.subr.mxu0 0.0
    %480 = vmatpush1.msra.mxu0 0.0
    %481 = vmatprep.subr.mxu0 0.0
    %482 = vmatpush1.msra.mxu0 0.0
    %483 = vmatprep.subr.mxu0 0.0
    %484 = vmatpush1.msra.mxu0 0.0
    %485 = vmatprep.subr.mxu0 0.0
    %486 = vmatpush1.msra.mxu0 0.0
    %487 = vmatprep.subr.mxu0 0.0
    %488 = vmatpush1.msra.mxu0 0.0
    %489 = vmatprep.subr.mxu0 0.0
    %490 = vmatpush1.msra.mxu0 0.0
    %491 = vmatprep.subr.mxu0 0.0
    %492 = vmatpush1.msra.mxu0 0.0
    %493 = vmatprep.subr.mxu0 0.0
    %494 = vmatpush1.msra.mxu0 0.0
    %495 = vmatprep.subr.mxu0 0.0
    %496 = vmatpush1.msra.mxu0 0.0
    %497 = vmatprep.subr.mxu0 0.0
    %498 = vmatpush1.msra.mxu0 0.0
    %499 = vmatprep.subr.mxu0 0.0
    %500 = vmatpush1.msra.mxu0 0.0
    %501 = vmatprep.subr.mxu0 0.0
    %502 = vmatpush1.msra.mxu0 0.0
    %503 = vmatprep.subr.mxu0 0.0
    %504 = vmatpush1.msra.mxu0 0.0
    %505 = vmatprep.subr.mxu0 0.0
    %506 = vmatpush1.msra.mxu0 0.0
    %507 = vmatprep.subr.mxu0 0.0
    %508 = vmatpush1.msra.mxu0 0.0
    %509 = vmatprep.subr.mxu0 0.0
    %510 = vmatpush1.msra.mxu0 0.0
    %511 = vmatprep.subr.mxu0 0.0
    %512 = vmatpush1.msra.mxu0 0.0
    %513 = vmatprep.subr.mxu0 0.0
    %514 = vmatpush1.msra.mxu0 0.0
    %515 = vmatprep.subr.mxu0 0.0
    %516 = vmatpush1.msra.mxu0 0.0
    %517 = vmatprep.subr.mxu0 0.0
    %518 = vmatpush1.msra.mxu0 0.0
    %519 = vmatprep.subr.mxu0 0.0
    %520 = vmatpush1.msra.mxu0 0.0
    %521 = vmatprep.mubr.f32.mxu0 0.0
    %v522 = vand.u32 %v27, 4294901760
    %523 = vmatmul.mubr.f32.gmra.mrb[0].mxu0 %v522
    %v524 = vpop.f32.mrb[0].mxu0
    %v525 = vadd.f32 %v446, %v524
    %v526 = vpop.f32.mrb[0].mxu0
    %527 = vmatprep.mubr.f32.mxu0 0.0
    %v528 = vand.u32 %v30, 4294901760
    %529 = vmatmul.mubr.f32.gmra.mrb[0].mxu0 %v528
    %v530 = vpop.f32.mrb[0].mxu0
    %v531 = vadd.f32 %v452, %v530
    %v532 = vpop.f32.mrb[0].mxu0
    %533 = vdwg.mxu0
    %534 = vst.msk [vmem:[#allocation5] sm:$0xff] %vm25, %v525
    %535 = vst.msk [vmem:[#allocation5 + $0x10] sm:$0xff] %vm25, %v531
    %538 = vrot.lane.b32.xlu0 %v525, 16
    %v539 = vpop.permute.xlu0 %538
    %540 = vrot.lane.b32.xlu0 %v531, 16
    %v541 = vpop.permute.xlu0 %540
    %vm544 = vcmask 261248
    %545 = vst.msk [vmem:[#allocation5] sm:$0xff] %vm544, %v539
    %546 = vst.msk [vmem:[#allocation5 + $0x10] sm:$0xff] %vm544, %v541
    %547 = vrot.lane.b32.xlu0 %v525, 32
    %v548 = vpop.permute.xlu0 %547
    %549 = vrot.lane.b32.xlu0 %v531, 32
    %v550 = vpop.permute.xlu0 %549
    %vm553 = vcmask 392448
    %554 = vst.msk [vmem:[#allocation5] sm:$0xff] %vm553, %v548
    %555 = vst.msk [vmem:[#allocation5 + $0x10] sm:$0xff] %vm553, %v550
    %556 = vrot.lane.b32.xlu0 %v525, 48
    %v557 = vpop.permute.xlu0 %556
    %558 = vrot.lane.b32.xlu0 %v531, 48
    %v559 = vpop.permute.xlu0 %558
    %vm562 = vcmask 523648
    %563 = vst.msk [vmem:[#allocation5] sm:$0xff] %vm562, %v557
    %564 = vst.msk [vmem:[#allocation5 + $0x10] sm:$0xff] %vm562, %v559
    %565 = vrot.lane.b32.xlu0 %v525, 64
    %v566 = vpop.permute.xlu0 %565
    %567 = vrot.lane.b32.xlu0 %v531, 64
    %v568 = vpop.permute.xlu0 %567
    %vm571 = vcmask 654848
    %572 = vst.msk [vmem:[#allocation5] sm:$0xff] %vm571, %v566
    %573 = vst.msk [vmem:[#allocation5 + $0x10] sm:$0xff] %vm571, %v568
    %574 = vrot.lane.b32.xlu0 %v525, 80
    %v575 = vpop.permute.xlu0 %574
    %576 = vrot.lane.b32.xlu0 %v531, 80
    %v577 = vpop.permute.xlu0 %576
    %vm580 = vcmask 786048
    %581 = vst.msk [vmem:[#allocation5] sm:$0xff] %vm580, %v575
    %582 = vst.msk [vmem:[#allocation5 + $0x10] sm:$0xff] %vm580, %v577
    %583 = vrot.lane.b32.xlu0 %v525, 96
    %v584 = vpop.permute.xlu0 %583
    %585 = vrot.lane.b32.xlu0 %v531, 96
    %v586 = vpop.permute.xlu0 %585
    %vm589 = vcmask 917248
    %590 = vst.msk [vmem:[#allocation5] sm:$0xff] %vm589, %v584
    %591 = vst.msk [vmem:[#allocation5 + $0x10] sm:$0xff] %vm589, %v586
    %592 = vrot.lane.b32.xlu0 %v525, 112
    %v593 = vpop.permute.xlu0 %592
    %594 = vrot.lane.b32.xlu0 %v531, 112
    %v595 = vpop.permute.xlu0 %594
    %vm598 = vcmask 1048448
    %599 = vst.msk [vmem:[#allocation5] sm:$0xff] %vm598, %v593
    %600 = vst.msk [vmem:[#allocation5 + $0x10] sm:$0xff] %vm598, %v595
    %601 = vst.msk [vmem:[#allocation5 + $0x8] sm:$0xff] %vm25, %v525
    %602 = vst.msk [vmem:[#allocation5 + $0x18] sm:$0xff] %vm25, %v531
    %603 = vst.msk [vmem:[#allocation5 + $0x8] sm:$0xff] %vm544, %v539
    %604 = vst.msk [vmem:[#allocation5 + $0x18] sm:$0xff] %vm544, %v541
    %605 = vst.msk [vmem:[#allocation5 + $0x8] sm:$0xff] %vm553, %v548
    %606 = vst.msk [vmem:[#allocation5 + $0x18] sm:$0xff] %vm553, %v550
    %607 = vst.msk [vmem:[#allocation5 + $0x8] sm:$0xff] %vm562, %v557
    %608 = vst.msk [vmem:[#allocation5 + $0x18] sm:$0xff] %vm562, %v559
    %609 = vst.msk [vmem:[#allocation5 + $0x8] sm:$0xff] %vm571, %v566
    %610 = vst.msk [vmem:[#allocation5 + $0x18] sm:$0xff] %vm571, %v568
    %611 = vst.msk [vmem:[#allocation5 + $0x8] sm:$0xff] %vm580, %v575
    %612 = vst.msk [vmem:[#allocation5 + $0x18] sm:$0xff] %vm580, %v577
    %613 = vst.msk [vmem:[#allocation5 + $0x8] sm:$0xff] %vm589, %v584
    %614 = vst.msk [vmem:[#allocation5 + $0x18] sm:$0xff] %vm589, %v586
    %615 = vst.msk [vmem:[#allocation5 + $0x8] sm:$0xff] %vm598, %v593
    %616 = vst.msk [vmem:[#allocation5 + $0x18] sm:$0xff] %vm598, %v595
    // Predicated region
    $region10: #{tpu_custom_call.1} parent=1 // pred_check
      _
    $region11: #{tpu_custom_call.1} parent=1 // pred_check_branch
      %618 = sbr.rel (0) target = $region13
    $region12: #{tpu_custom_call.1} parent=1 // pred_region
      %s620 = ssub.s32 512, 512
      %621 = vsyncadd [#allocation4], %s620
      %s622 = sshll.u32 [#allocation5], 4
      %s623 = int_to_ptr.vmem [resolvable:$true] %s622
      %628 = dma.vmem_to_hbm [thread:$0]  %s623, 512, %s1, [#allocation4], 256, 256, 16
    $region13: #{tpu_custom_call.1} parent=1 // pred_fallthru
      _
    // Predicated region
    $region14: #{tpu_custom_call.1} parent=1 // pred_check
      _
    $region15: #{tpu_custom_call.1} parent=1 // pred_check_branch
      %630 = sbr.rel (0) target = $region17
    $region16: #{tpu_custom_call.1} parent=1 // pred_region
      %631 = dma.done [#allocation4], 512
    $region17: #{tpu_custom_call.1} parent=1 // pred_fallthru
      _
    %632 = vsyncpa [#allocation3], 1
    %633 = vsyncpa [#allocation4], 1

</llo_original>
